<compile_context>
chip_gen: v5e
topology: v5e:2x2
jax: 0.10.0
libtpu: 0.0.40
codegen_flags: <defaults>
</compile_context>

<pallas_src>
import jax
import jax.numpy as jnp
from jax.experimental import pallas as pl
from jax.experimental.pallas import tpu as pltpu


# ----------------------------- config ---------------------------------------
class MLAConfig:
    def __init__(self, dim=256, num_heads=4):
        self.dim = dim
        self.num_heads = num_heads
        self.per_head_dim = dim // num_heads                       # 64
        self.dim_prime_compressed = self.per_head_dim * num_heads // 16
        self.dim_compressed = self.per_head_dim * num_heads // 16


# ----------------------------- Pallas kernel --------------------------------
def _fused_qkv_kernel(k_ref, q_ref, v_ref, wk_ref, wq_ref, wv_ref, b_ref, o_ref):
    # out = k @ Wk_pad + q @ Wq_pad + v @ Wv_pad + b
    # Each W*_pad is (D_in_i, 3*d) with its true weight in its own 64-wide
    # column block and zeros elsewhere, so the sum is exactly [K | Q | V].
    acc = jnp.dot(k_ref[...].astype(jnp.bfloat16), wk_ref[...],
                  preferred_element_type=jnp.float32)
    acc = acc + jnp.dot(q_ref[...].astype(jnp.bfloat16), wq_ref[...],
                        preferred_element_type=jnp.float32)
    acc = acc + jnp.dot(v_ref[...].astype(jnp.bfloat16), wv_ref[...],
                        preferred_element_type=jnp.float32)
    o_ref[...] = (acc + b_ref[...]).astype(o_ref.dtype)


def fused_qkv_projection(k2d, q2d, v2d, wk_pad, wq_pad, wv_pad, bias, *,
                         tm_max=4096,
                         vmem_limit_bytes=40 * 1024 * 1024,
                         out_dtype=jnp.float32):
    """k2d,q2d: (M, 2d) f32; v2d: (M, d) f32; W*_pad: bf16 padded to (*, 3d);
    bias: (1, 3d) f32.  Returns (M, 3d) out_dtype = [K | Q | V].

    tm_max=4096 keeps double-buffered activation+output traffic (~17 MB) well
    inside the 40 MiB scoped-VMEM budget, which is safe on v7x's 64 MiB VMEM
    while amortizing the ~0.35 us/grid-step overhead on all generations.
    """
    M = k2d.shape[0]
    d_out = bias.shape[-1]

    # Row tile: full M when small (block == full array dim, so no (8,128)
    # constraint issue), else a multiple of 8; last grid step may be partial
    # (Pallas masks the partial block on load and store).
    tm = M if M <= tm_max else tm_max
    grid = (pl.cdiv(M, tm),)

    def row_spec(width):
        return pl.BlockSpec((tm, width), lambda i: (i, 0))

    def resident_spec(shape):
        return pl.BlockSpec(shape, lambda i: (0, 0))

    return pl.pallas_call(
        _fused_qkv_kernel,
        out_shape=jax.ShapeDtypeStruct((M, d_out), out_dtype),
        grid_spec=pltpu.PrefetchScalarGridSpec(
            num_scalar_prefetch=0,
            grid=grid,
            in_specs=[
                row_spec(k2d.shape[1]),
                row_spec(q2d.shape[1]),
                row_spec(v2d.shape[1]),
                resident_spec(wk_pad.shape),
                resident_spec(wq_pad.shape),
                resident_spec(wv_pad.shape),
                resident_spec(bias.shape),
            ],
            out_specs=row_spec(d_out),
        ),
        compiler_params=pltpu.CompilerParams(
            dimension_semantics=("parallel",),      # shard M across TCs (v7x)
            vmem_limit_bytes=vmem_limit_bytes,      # explicit; safe on v5e/v6e/v7x
        ),
    )(k2d, q2d, v2d, wk_pad, wq_pad, wv_pad, bias)


# ----------------------------- SingleHead module ----------------------------
class SingleHead:
    """JAX/Pallas port of the PyTorch SingleHead module (fused K/Q/V projection)."""

    def __init__(self, config, key, *, min_rows_for_pallas=0):
        d = config.per_head_dim
        self.d = d
        # Below this many rows, fall back to plain jnp (launch overhead wins).
        # Default 0 so the demo exercises the Pallas path; set ~1024 in prod.
        self.min_rows_for_pallas = min_rows_for_pallas

        k1, k2, k3, k4, k5, k6 = jax.random.split(key, 6)
        # Weights stored as (D_in, D_out) so the hot path is x @ W (== nn.Linear's x @ W.T).
        scale_kq = 1.0 / jnp.sqrt(2.0 * d)
        scale_v = 1.0 / jnp.sqrt(1.0 * d)
        self.W_K_w = jax.random.normal(k1, (2 * d, d), jnp.float32) * scale_kq
        self.W_K_b = jax.random.normal(k2, (1, d), jnp.float32) * 0.01
        self.W_Q_w = jax.random.normal(k3, (2 * d, d), jnp.float32) * scale_kq
        self.W_Q_b = jax.random.normal(k4, (1, d), jnp.float32) * 0.01
        self.W_V_w = jax.random.normal(k5, (d, d), jnp.float32) * scale_v
        self.W_V_b = jax.random.normal(k6, (1, d), jnp.float32) * 0.01

        # Pre-pack zero-padded bf16 weight blocks and the fused bias once.
        # TODO(synk): if exact f32 nn.Linear parity is required, keep f32 weights
        # here and drop the bf16 casts in the kernel (still memory-bound).
        d_out = 3 * d
        wk = jnp.zeros((2 * d, d_out), jnp.float32).at[:, 0 * d:1 * d].set(self.W_K_w)
        wq = jnp.zeros((2 * d, d_out), jnp.float32).at[:, 1 * d:2 * d].set(self.W_Q_w)
        wv = jnp.zeros((d, d_out), jnp.float32).at[:, 2 * d:3 * d].set(self.W_V_w)
        self._wk_pad = wk.astype(jnp.bfloat16)
        self._wq_pad = wq.astype(jnp.bfloat16)
        self._wv_pad = wv.astype(jnp.bfloat16)
        self._bias = jnp.concatenate([self.W_K_b, self.W_Q_b, self.W_V_b], axis=-1)

    # ---- packed slab path: preferred when the consumer lives in the same jit.
    def project_packed(self, q, k, v, *, out_dtype=jnp.float32):
        """Returns a (*lead, 3, d) slab: [..., 0, :]=K, [..., 1, :]=Q, [..., 2, :]=V.
        The reshape from the lane-dense (M, 3d) kernel output is contiguous -> free."""
        d = self.d
        lead = q.shape[:-1]
        q2d = q.reshape(-1, q.shape[-1])
        k2d = k.reshape(-1, k.shape[-1])
        v2d = v.reshape(-1, v.shape[-1])
        M = q2d.shape[0]

        if M < self.min_rows_for_pallas:
            # Tiny-M fallback: a single pallas_call launch costs more than the work.
            out = jnp.concatenate(
                [k2d @ self.W_K_w + self.W_K_b,
                 q2d @ self.W_Q_w + self.W_Q_b,
                 v2d @ self.W_V_w + self.W_V_b], axis=-1).astype(out_dtype)
        else:
            out = fused_qkv_projection(k2d, q2d, v2d,
                                       self._wk_pad, self._wq_pad, self._wv_pad,
                                       self._bias, out_dtype=out_dtype)
        return out.reshape(*lead, 3, d)

    # ---- PyTorch-compatible forward: returns (K, Q, V).
    def __call__(self, q, k, v):
        slab = self.project_packed(q, k, v)
        K = slab[..., 0, :]
        Q = slab[..., 1, :]
        V = slab[..., 2, :]
        return (K, Q, V)


# ----------------------------- main ------------------------------------------
if __name__ == "__main__":
    config = MLAConfig()              # per_head_dim = 64
    d = config.per_head_dim

    key = jax.random.PRNGKey(0)
    kq, kk, kv, kp, kt = jax.random.split(key, 5)

    batch, seq = 2, 8
    q = jax.random.normal(kq, (batch, seq, 2 * d), jnp.float32)
    k = jax.random.normal(kk, (batch, seq, 2 * d), jnp.float32)
    v = jax.random.normal(kv, (batch, seq, d), jnp.float32)

    head = SingleHead(config, kp)     # min_rows_for_pallas=0 -> Pallas path runs
    K, Q, V = head(q, k, v)
    jax.block_until_ready((K, Q, V))

    # Reference: same bf16 rounding of operands, f32 accumulation.
    def ref_linear_bf16(x2d, w, b):
        xb = x2d.astype(jnp.bfloat16).astype(jnp.float32)
        wb = w.astype(jnp.bfloat16).astype(jnp.float32)
        return xb @ wb + b

    K_ref = ref_linear_bf16(k.reshape(-1, 2 * d), head.W_K_w, head.W_K_b)
    Q_ref = ref_linear_bf16(q.reshape(-1, 2 * d), head.W_Q_w, head.W_Q_b)
    V_ref = ref_linear_bf16(v.reshape(-1, d), head.W_V_w, head.W_V_b)

    assert jnp.allclose(K.reshape(-1, d), K_ref, atol=1e-2, rtol=1e-2)
    assert jnp.allclose(Q.reshape(-1, d), Q_ref, atol=1e-2, rtol=1e-2)
    assert jnp.allclose(V.reshape(-1, d), V_ref, atol=1e-2, rtol=1e-2)

    # Sanity vs full-f32 reference (bf16 operand rounding tolerance).
    K_f32 = k.reshape(-1, 2 * d) @ head.W_K_w + head.W_K_b
    assert jnp.allclose(K.reshape(-1, d), K_f32, atol=5e-2, rtol=5e-2)

    assert K.shape == (batch, seq, d) and Q.shape == (batch, seq, d) and V.shape == (batch, seq, d)

    # Packed-slab path shape check.
    slab = head.project_packed(q, k, v)
    jax.block_until_ready(slab)
    assert slab.shape == (batch, seq, 3, d)
    assert jnp.allclose(slab[..., 0, :].reshape(-1, d), K_ref, atol=1e-2, rtol=1e-2)

    # Tail-block test: M not a multiple of tm (M=520, tm=256 -> grid=(3,), tail=8 rows).
    Mtail = 520
    kt1, kt2, kt3 = jax.random.split(kt, 3)
    kq_t = jax.random.normal(kt1, (Mtail, 2 * d), jnp.float32)
    kk_t = jax.random.normal(kt2, (Mtail, 2 * d), jnp.float32)
    kv_t = jax.random.normal(kt3, (Mtail, d), jnp.float32)
    out_t = fused_qkv_projection(kk_t, kq_t, kv_t,
                                 head._wk_pad, head._wq_pad, head._wv_pad,
                                 head._bias, tm_max=256)
    jax.block_until_ready(out_t)
    K_t_ref = ref_linear_bf16(kk_t, head.W_K_w, head.W_K_b)
    Q_t_ref = ref_linear_bf16(kq_t, head.W_Q_w, head.W_Q_b)
    V_t_ref = ref_linear_bf16(kv_t, head.W_V_w, head.W_V_b)
    assert jnp.allclose(out_t[:, 0 * d:1 * d], K_t_ref, atol=1e-2, rtol=1e-2)
    assert jnp.allclose(out_t[:, 1 * d:2 * d], Q_t_ref, atol=1e-2, rtol=1e-2)
    assert jnp.allclose(out_t[:, 2 * d:3 * d], V_t_ref, atol=1e-2, rtol=1e-2)

    print("KERNEL_OK")
</pallas_src>

<mosaic_0001>
module attributes {stable_mosaic.version = 11 : i64} {
  func.func @_fused_qkv_kernel(%arg0: i32, %arg1: memref<16x128xf32, #tpu.memory_space<vmem>>, %arg2: memref<16x128xf32, #tpu.memory_space<vmem>>, %arg3: memref<16x64xf32, #tpu.memory_space<vmem>>, %arg4: memref<128x192xbf16, #tpu.memory_space<vmem>>, %arg5: memref<128x192xbf16, #tpu.memory_space<vmem>>, %arg6: memref<64x192xbf16, #tpu.memory_space<vmem>>, %arg7: memref<1x192xf32, #tpu.memory_space<vmem>>, %arg8: memref<16x192xf32, #tpu.memory_space<vmem>>) attributes {dimension_semantics = [#tpu.dimension_semantics<parallel>], iteration_bounds = array<i64: 1>, scalar_prefetch = 0 : i64, scratch_operands = 0 : i64, tpu.core_type = #tpu.core_type<tc>, window_params = [{transform_indices = @transform_0, window_bounds = array<i64: 16, 128>}, {transform_indices = @transform_1, window_bounds = array<i64: 16, 128>}, {transform_indices = @transform_2, window_bounds = array<i64: 16, 64>}, {pipeline_mode = #tpu.pipeline_mode<synchronous>, transform_indices = @transform_3, window_bounds = array<i64: 128, 192>}, {pipeline_mode = #tpu.pipeline_mode<synchronous>, transform_indices = @transform_4, window_bounds = array<i64: 128, 192>}, {pipeline_mode = #tpu.pipeline_mode<synchronous>, transform_indices = @transform_5, window_bounds = array<i64: 64, 192>}, {pipeline_mode = #tpu.pipeline_mode<synchronous>, transform_indices = @transform_6, window_bounds = array<i64: 1, 192>}, {transform_indices = @transform_7, window_bounds = array<i64: 16, 192>}]} {
    %c0 = arith.constant 0 : index
    %c0_0 = arith.constant 0 : index
    %0 = vector.load %arg1[%c0, %c0_0] : memref<16x128xf32, #tpu.memory_space<vmem>>, vector<16x128xf32>
    %1 = arith.truncf %0 : vector<16x128xf32> to vector<16x128xbf16>
    %c0_1 = arith.constant 0 : index
    %c0_2 = arith.constant 0 : index
    %2 = vector.load %arg4[%c0_1, %c0_2] : memref<128x192xbf16, #tpu.memory_space<vmem>>, vector<128x192xbf16>
    %cst = arith.constant dense<0.000000e+00> : vector<16x192xf32>
    %3 = tpu.matmul %1, %2, %cst {dimension_numbers = #tpu.dot_dimension_numbers<[1], [0], [0], [1], [0, 0, 1, 1], [], []>} : vector<16x128xbf16>, vector<128x192xbf16>, vector<16x192xf32> -> vector<16x192xf32>
    %c0_3 = arith.constant 0 : index
    %c0_4 = arith.constant 0 : index
    %4 = vector.load %arg2[%c0_3, %c0_4] : memref<16x128xf32, #tpu.memory_space<vmem>>, vector<16x128xf32>
    %5 = arith.truncf %4 : vector<16x128xf32> to vector<16x128xbf16>
    %c0_5 = arith.constant 0 : index
    %c0_6 = arith.constant 0 : index
    %6 = vector.load %arg5[%c0_5, %c0_6] : memref<128x192xbf16, #tpu.memory_space<vmem>>, vector<128x192xbf16>
    %cst_7 = arith.constant dense<0.000000e+00> : vector<16x192xf32>
    %7 = tpu.matmul %5, %6, %cst_7 {dimension_numbers = #tpu.dot_dimension_numbers<[1], [0], [0], [1], [0, 0, 1, 1], [], []>} : vector<16x128xbf16>, vector<128x192xbf16>, vector<16x192xf32> -> vector<16x192xf32>
    %8 = arith.addf %3, %7 : vector<16x192xf32>
    %c0_8 = arith.constant 0 : index
    %c0_9 = arith.constant 0 : index
    %9 = vector.load %arg3[%c0_8, %c0_9] : memref<16x64xf32, #tpu.memory_space<vmem>>, vector<16x64xf32>
    %10 = arith.truncf %9 : vector<16x64xf32> to vector<16x64xbf16>
    %c0_10 = arith.constant 0 : index
    %c0_11 = arith.constant 0 : index
    %11 = vector.load %arg6[%c0_10, %c0_11] : memref<64x192xbf16, #tpu.memory_space<vmem>>, vector<64x192xbf16>
    %cst_12 = arith.constant dense<0.000000e+00> : vector<16x192xf32>
    %12 = tpu.matmul %10, %11, %cst_12 {dimension_numbers = #tpu.dot_dimension_numbers<[1], [0], [0], [1], [0, 0, 1, 1], [], []>} : vector<16x64xbf16>, vector<64x192xbf16>, vector<16x192xf32> -> vector<16x192xf32>
    %13 = arith.addf %8, %12 : vector<16x192xf32>
    %c0_13 = arith.constant 0 : index
    %c0_14 = arith.constant 0 : index
    %14 = vector.load %arg7[%c0_13, %c0_14] : memref<1x192xf32, #tpu.memory_space<vmem>>, vector<1x192xf32>
    %15 = vector.broadcast %14 : vector<1x192xf32> to vector<16x192xf32>
    %16 = arith.addf %13, %15 : vector<16x192xf32>
    %c0_15 = arith.constant 0 : index
    %c0_16 = arith.constant 0 : index
    %17 = vector.load %arg8[%c0_15, %c0_16] : memref<16x192xf32, #tpu.memory_space<vmem>>, vector<16x192xf32>
    tpu.vector_store %arg8[%c0_15, %c0_16], %16 {strides = array<i32>} : memref<16x192xf32, #tpu.memory_space<vmem>>, vector<16x192xf32>,
    return
  }
  func.func @transform_0(%arg0: i32) -> (i32, i32) {
    %c0_i32 = arith.constant 0 : i32
    %c0_i32_0 = arith.constant 0 : i32
    return %arg0, %c0_i32 : i32, i32
  }
  func.func @transform_1(%arg0: i32) -> (i32, i32) {
    %c0_i32 = arith.constant 0 : i32
    %c0_i32_0 = arith.constant 0 : i32
    return %arg0, %c0_i32 : i32, i32
  }
  func.func @transform_2(%arg0: i32) -> (i32, i32) {
    %c0_i32 = arith.constant 0 : i32
    %c0_i32_0 = arith.constant 0 : i32
    return %arg0, %c0_i32 : i32, i32
  }
  func.func @transform_3(%arg0: i32) -> (i32, i32) {
    %c0_i32 = arith.constant 0 : i32
    %c0_i32_0 = arith.constant 0 : i32
    %c0_i32_1 = arith.constant 0 : i32
    return %c0_i32, %c0_i32_0 : i32, i32
  }
  func.func @transform_4(%arg0: i32) -> (i32, i32) {
    %c0_i32 = arith.constant 0 : i32
    %c0_i32_0 = arith.constant 0 : i32
    %c0_i32_1 = arith.constant 0 : i32
    return %c0_i32, %c0_i32_0 : i32, i32
  }
  func.func @transform_5(%arg0: i32) -> (i32, i32) {
    %c0_i32 = arith.constant 0 : i32
    %c0_i32_0 = arith.constant 0 : i32
    %c0_i32_1 = arith.constant 0 : i32
    return %c0_i32, %c0_i32_0 : i32, i32
  }
  func.func @transform_6(%arg0: i32) -> (i32, i32) {
    %c0_i32 = arith.constant 0 : i32
    %c0_i32_0 = arith.constant 0 : i32
    %c0_i32_1 = arith.constant 0 : i32
    return %c0_i32, %c0_i32_0 : i32, i32
  }
  func.func @transform_7(%arg0: i32) -> (i32, i32) {
    %c0_i32 = arith.constant 0 : i32
    %c0_i32_0 = arith.constant 0 : i32
    return %arg0, %c0_i32 : i32, i32
  }
}

</mosaic_0001>

<llo_original>
// kernel: tpu_custom_call.1
$region0: #{tpu_custom_call.1}
  #allocation0 [shape = 'u32[]', space=smem, size = 0x4, offset = 0x4, fixed_abs, tag = 'smem constant byte address 0x4 - core index']
  #allocation1 [shape = 'u32[72,128]{1,0:T(1,128)}', space=vmem, size = 0x9000, scoped, tag = 'internal scratch']
  %s0 = inlined_call_operand.vmem [shape: f32[16,128], index: 0, kind: input, shape index: {}]
  %s1 = inlined_call_operand.vmem [shape: f32[16,128], index: 1, kind: input, shape index: {}]
  %s2 = inlined_call_operand.vmem [shape: f32[16,64], index: 2, kind: input, shape index: {}]
  %s3 = inlined_call_operand.vmem [shape: bf16[128,192], index: 3, kind: input, shape index: {}]
  %s4 = inlined_call_operand.vmem [shape: bf16[128,192], index: 4, kind: input, shape index: {}]
  %s5 = inlined_call_operand.vmem [shape: bf16[64,192], index: 5, kind: input, shape index: {}]
  %s6 = inlined_call_operand.vmem [shape: f32[1,192], index: 6, kind: input, shape index: {}]
  %s7 = inlined_call_operand.hbm [shape: f32[16,192], index: 7, kind: output, shape index: {}]
  %s8 = sld [smem:[#allocation0]]
  $region38: #{tpu_custom_call.1} parent=0
    _
  %s10 = ssub.s32 1, %s8
  %s11 = scalar_select 0, %s10, %s8
  $region1: #{tpu_custom_call.1} parent=0
    #allocation2 [shape = 'u8[16384]{0}', space=vmem, size = 0x4000, scoped, tag = 'output window, operand 0, single buffered']
    #allocation3 [shape = 's32[1]{0}', space=sflag, size = 0x4, scoped, tag = 'scoped memory for tpu_custom_call.1']
    %12 = vsyncpa [#allocation3], 0
    // Predicated region
    $region2: #{tpu_custom_call.1} parent=1 // pred_check
      _
    $region3: #{tpu_custom_call.1} parent=1 // pred_check_branch
      %14 = sbr.rel (0) target = $region5
    $region4: #{tpu_custom_call.1} parent=1 // pred_region
      _
    $region5: #{tpu_custom_call.1} parent=1 // pred_fallthru
      _
    // Predicated region
    $region6: #{tpu_custom_call.1} parent=1 // pred_check
      _
    $region7: #{tpu_custom_call.1} parent=1 // pred_check_branch
      %16 = sbr.rel (0) target = $region9
    $region8: #{tpu_custom_call.1} parent=1 // pred_region
      _
    $region9: #{tpu_custom_call.1} parent=1 // pred_fallthru
      _
    // Predicated region
    $region10: #{tpu_custom_call.1} parent=1 // pred_check
      _
    $region11: #{tpu_custom_call.1} parent=1 // pred_check_branch
      %18 = sbr.rel (0) target = $region13
    $region12: #{tpu_custom_call.1} parent=1 // pred_region
      _
    $region13: #{tpu_custom_call.1} parent=1 // pred_fallthru
      _
    // Predicated region
    $region14: #{tpu_custom_call.1} parent=1 // pred_check
      _
    $region15: #{tpu_custom_call.1} parent=1 // pred_check_branch
      %20 = sbr.rel (0) target = $region17
    $region16: #{tpu_custom_call.1} parent=1 // pred_region
      _
    $region17: #{tpu_custom_call.1} parent=1 // pred_fallthru
      _
    // Predicated region
    $region18: #{tpu_custom_call.1} parent=1 // pred_check
      _
    $region19: #{tpu_custom_call.1} parent=1 // pred_check_branch
      %22 = sbr.rel (0) target = $region21
    $region20: #{tpu_custom_call.1} parent=1 // pred_region
      _
    $region21: #{tpu_custom_call.1} parent=1 // pred_fallthru
      _
    // Predicated region
    $region22: #{tpu_custom_call.1} parent=1 // pred_check
      _
    $region23: #{tpu_custom_call.1} parent=1 // pred_check_branch
      %24 = sbr.rel (0) target = $region25
    $region24: #{tpu_custom_call.1} parent=1 // pred_region
      _
    $region25: #{tpu_custom_call.1} parent=1 // pred_fallthru
      _
    // Predicated region
    $region26: #{tpu_custom_call.1} parent=1 // pred_check
      _
    $region27: #{tpu_custom_call.1} parent=1 // pred_check_branch
      %26 = sbr.rel (0) target = $region29
    $region28: #{tpu_custom_call.1} parent=1 // pred_region
      _
    $region29: #{tpu_custom_call.1} parent=1 // pred_fallthru
      _
    %v28 = vld [vmem:[%s0] sm:$0xff]
    %v29 = vld [vmem:[%s0 + $0x8] sm:$0xff]
    %v30 = vpack.c.bf16 %v29, %v28
    %v31 = vld [vmem:[%s3] sm:$0xff]
    %v32 = vld [vmem:[%s3 + $0x8] sm:$0xff]
    %v33 = vld [vmem:[%s3 + $0x10] sm:$0xff]
    %v34 = vld [vmem:[%s3 + $0x18] sm:$0xff]
    %v35 = vld [vmem:[%s3 + $0x20] sm:$0xff]
    %v36 = vld [vmem:[%s3 + $0x28] sm:$0xff]
    %v37 = vld [vmem:[%s3 + $0x30] sm:$0xff]
    %v38 = vld [vmem:[%s3 + $0x38] sm:$0xff]
    %v39 = vld [vmem:[%s3 + $0x40] sm:$0xff]
    %v40 = vld [vmem:[%s3 + $0x48] sm:$0xff]
    %v41 = vld [vmem:[%s3 + $0x50] sm:$0xff]
    %v42 = vld [vmem:[%s3 + $0x58] sm:$0xff]
    %v43 = vld [vmem:[%s3 + $0x60] sm:$0xff]
    %v44 = vld [vmem:[%s3 + $0x68] sm:$0xff]
    %v45 = vld [vmem:[%s3 + $0x70] sm:$0xff]
    %v46 = vld [vmem:[%s3 + $0x78] sm:$0xff]
    %v47 = vld [vmem:[%s1] sm:$0xff]
    %v48 = vld [vmem:[%s1 + $0x8] sm:$0xff]
    %v49 = vpack.c.bf16 %v48, %v47
    %v50 = vld [vmem:[%s4] sm:$0xff]
    %v51 = vld [vmem:[%s4 + $0x8] sm:$0xff]
    %v52 = vld [vmem:[%s4 + $0x10] sm:$0xff]
    %v53 = vld [vmem:[%s4 + $0x18] sm:$0xff]
    %v54 = vld [vmem:[%s4 + $0x20] sm:$0xff]
    %v55 = vld [vmem:[%s4 + $0x28] sm:$0xff]
    %v56 = vld [vmem:[%s4 + $0x30] sm:$0xff]
    %v57 = vld [vmem:[%s4 + $0x38] sm:$0xff]
    %v58 = vld [vmem:[%s4 + $0x40] sm:$0xff]
    %v59 = vld [vmem:[%s4 + $0x48] sm:$0xff]
    %v60 = vld [vmem:[%s4 + $0x50] sm:$0xff]
    %v61 = vld [vmem:[%s4 + $0x58] sm:$0xff]
    %v62 = vld [vmem:[%s4 + $0x60] sm:$0xff]
    %v63 = vld [vmem:[%s4 + $0x68] sm:$0xff]
    %v64 = vld [vmem:[%s4 + $0x70] sm:$0xff]
    %v65 = vld [vmem:[%s4 + $0x78] sm:$0xff]
    %v82 = vunpack.c.l.b16 %v50
    %v83 = vunpack.c.h.b16 %v50
    %v84 = vunpack.c.l.b16 %v51
    %v85 = vunpack.c.h.b16 %v51
    %v86 = vunpack.c.l.b16 %v52
    %v87 = vunpack.c.h.b16 %v52
    %v88 = vunpack.c.l.b16 %v53
    %v89 = vunpack.c.h.b16 %v53
    %v90 = vunpack.c.l.b16 %v54
    %v91 = vunpack.c.h.b16 %v54
    %v92 = vunpack.c.l.b16 %v55
    %v93 = vunpack.c.h.b16 %v55
    %v94 = vunpack.c.l.b16 %v56
    %v95 = vunpack.c.h.b16 %v56
    %v96 = vunpack.c.l.b16 %v57
    %v97 = vunpack.c.h.b16 %v57
    %v98 = vunpack.c.l.b16 %v58
    %v99 = vunpack.c.h.b16 %v58
    %v100 = vunpack.c.l.b16 %v59
    %v101 = vunpack.c.h.b16 %v59
    %v102 = vunpack.c.l.b16 %v60
    %v103 = vunpack.c.h.b16 %v60
    %v104 = vunpack.c.l.b16 %v61
    %v105 = vunpack.c.h.b16 %v61
    %v106 = vunpack.c.l.b16 %v62
    %v107 = vunpack.c.h.b16 %v62
    %v108 = vunpack.c.l.b16 %v63
    %v109 = vunpack.c.h.b16 %v63
    %v110 = vunpack.c.l.b16 %v64
    %v111 = vunpack.c.h.b16 %v64
    %v112 = vunpack.c.l.b16 %v65
    %v113 = vunpack.c.h.b16 %v65
    %v114 = vpack.c.b16 %v84, %v82
    %v115 = vpack.c.b16 %v85, %v83
    %v116 = vpack.c.b16 %v88, %v86
    %v117 = vpack.c.b16 %v89, %v87
    %v118 = vpack.c.b16 %v92, %v90
    %v119 = vpack.c.b16 %v93, %v91
    %v120 = vpack.c.b16 %v96, %v94
    %v121 = vpack.c.b16 %v97, %v95
    %v122 = vpack.c.b16 %v100, %v98
    %v123 = vpack.c.b16 %v101, %v99
    %v124 = vpack.c.b16 %v104, %v102
    %v125 = vpack.c.b16 %v105, %v103
    %v126 = vpack.c.b16 %v108, %v106
    %v127 = vpack.c.b16 %v109, %v107
    %v128 = vpack.c.b16 %v112, %v110
    %v129 = vpack.c.b16 %v113, %v111
    %146 = vmatpush.bf16.msra.mxu0 %v128
    %147 = vmatpush.bf16.msra.mxu0 %v126
    %148 = vmatpush.bf16.msra.mxu0 %v124
    %149 = vmatpush.bf16.msra.mxu0 %v122
    %150 = vmatpush.bf16.msra.mxu0 %v120
    %151 = vmatpush.bf16.msra.mxu0 %v118
    %152 = vmatpush.bf16.msra.mxu0 %v116
    %153 = vmatpush.bf16.msra.mxu0 %v114
    %154 = vmatmul.bf16.gmra.mxu0 %v49
    %v155 = vpop.f32.mrf.mxu0
    %v156 = vadd.f32 0.0, %v155
    %v157 = vpop.f32.mrf.mxu0
    %v158 = vadd.f32 0.0, %v157
    %159 = vdwg.mxu0
    %160 = vmatpush.bf16.msra.mxu0 %v129
    %161 = vmatpush.bf16.msra.mxu0 %v127
    %162 = vmatpush.bf16.msra.mxu0 %v125
    %163 = vmatpush.bf16.msra.mxu0 %v123
    %164 = vmatpush.bf16.msra.mxu0 %v121
    %165 = vmatpush.bf16.msra.mxu0 %v119
    %166 = vmatpush.bf16.msra.mxu0 %v117
    %167 = vmatpush.bf16.msra.mxu0 %v115
    %168 = vmatmul.bf16.gmra.mxu0 %v49
    %v169 = vpop.f32.mrf.mxu0
    %v170 = vadd.f32 0.0, %v169
    %v171 = vpop.f32.mrf.mxu0
    %v172 = vadd.f32 0.0, %v171
    %173 = vdwg.mxu0
    %v190 = vunpack.c.l.b16 %v31
    %v191 = vunpack.c.h.b16 %v31
    %v192 = vunpack.c.l.b16 %v32
    %v193 = vunpack.c.h.b16 %v32
    %v194 = vunpack.c.l.b16 %v33
    %v195 = vunpack.c.h.b16 %v33
    %v196 = vunpack.c.l.b16 %v34
    %v197 = vunpack.c.h.b16 %v34
    %v198 = vunpack.c.l.b16 %v35
    %v199 = vunpack.c.h.b16 %v35
    %v200 = vunpack.c.l.b16 %v36
    %v201 = vunpack.c.h.b16 %v36
    %v202 = vunpack.c.l.b16 %v37
    %v203 = vunpack.c.h.b16 %v37
    %v204 = vunpack.c.l.b16 %v38
    %v205 = vunpack.c.h.b16 %v38
    %v206 = vunpack.c.l.b16 %v39
    %v207 = vunpack.c.h.b16 %v39
    %v208 = vunpack.c.l.b16 %v40
    %v209 = vunpack.c.h.b16 %v40
    %v210 = vunpack.c.l.b16 %v41
    %v211 = vunpack.c.h.b16 %v41
    %v212 = vunpack.c.l.b16 %v42
    %v213 = vunpack.c.h.b16 %v42
    %v214 = vunpack.c.l.b16 %v43
    %v215 = vunpack.c.h.b16 %v43
    %v216 = vunpack.c.l.b16 %v44
    %v217 = vunpack.c.h.b16 %v44
    %v218 = vunpack.c.l.b16 %v45
    %v219 = vunpack.c.h.b16 %v45
    %v220 = vunpack.c.l.b16 %v46
    %v221 = vunpack.c.h.b16 %v46
    %v222 = vpack.c.b16 %v192, %v190
    %v223 = vpack.c.b16 %v193, %v191
    %v224 = vpack.c.b16 %v196, %v194
    %v225 = vpack.c.b16 %v197, %v195
    %v226 = vpack.c.b16 %v200, %v198
    %v227 = vpack.c.b16 %v201, %v199
    %v228 = vpack.c.b16 %v204, %v202
    %v229 = vpack.c.b16 %v205, %v203
    %v230 = vpack.c.b16 %v208, %v206
    %v231 = vpack.c.b16 %v209, %v207
    %v232 = vpack.c.b16 %v212, %v210
    %v233 = vpack.c.b16 %v213, %v211
    %v234 = vpack.c.b16 %v216, %v214
    %v235 = vpack.c.b16 %v217, %v215
    %v236 = vpack.c.b16 %v220, %v218
    %v237 = vpack.c.b16 %v221, %v219
    %254 = vmatpush.bf16.msra.mxu0 %v236
    %255 = vmatpush.bf16.msra.mxu0 %v234
    %256 = vmatpush.bf16.msra.mxu0 %v232
    %257 = vmatpush.bf16.msra.mxu0 %v230
    %258 = vmatpush.bf16.msra.mxu0 %v228
    %259 = vmatpush.bf16.msra.mxu0 %v226
    %260 = vmatpush.bf16.msra.mxu0 %v224
    %261 = vmatpush.bf16.msra.mxu0 %v222
    %262 = vmatmul.bf16.gmra.mxu0 %v30
    %v263 = vpop.f32.mrf.mxu0
    %v264 = vadd.f32 %v156, %v263
    %v265 = vpop.f32.mrf.mxu0
    %v266 = vadd.f32 %v158, %v265
    %267 = vdwg.mxu0
    %268 = vmatpush.bf16.msra.mxu0 %v237
    %269 = vmatpush.bf16.msra.mxu0 %v235
    %270 = vmatpush.bf16.msra.mxu0 %v233
    %271 = vmatpush.bf16.msra.mxu0 %v231
    %272 = vmatpush.bf16.msra.mxu0 %v229
    %273 = vmatpush.bf16.msra.mxu0 %v227
    %274 = vmatpush.bf16.msra.mxu0 %v225
    %275 = vmatpush.bf16.msra.mxu0 %v223
    %276 = vmatmul.bf16.gmra.mxu0 %v30
    %v277 = vpop.f32.mrf.mxu0
    %v278 = vadd.f32 %v170, %v277
    %v279 = vpop.f32.mrf.mxu0
    %v280 = vadd.f32 %v172, %v279
    %281 = vdwg.mxu0
    %v282 = vld [vmem:[%s2] sm:$0xff]
    %v283 = vld [vmem:[%s2 + $0x8] sm:$0xff]
    %v284 = vpack.c.bf16 %v283, %v282
    %v285 = vld [vmem:[%s5] sm:$0xff]
    %v286 = vld [vmem:[%s5 + $0x8] sm:$0xff]
    %v287 = vld [vmem:[%s5 + $0x10] sm:$0xff]
    %v288 = vld [vmem:[%s5 + $0x18] sm:$0xff]
    %v289 = vld [vmem:[%s5 + $0x20] sm:$0xff]
    %v290 = vld [vmem:[%s5 + $0x28] sm:$0xff]
    %v291 = vld [vmem:[%s5 + $0x30] sm:$0xff]
    %v292 = vld [vmem:[%s5 + $0x38] sm:$0xff]
    %v301 = vunpack.c.l.b16 %v285
    %v302 = vunpack.c.h.b16 %v285
    %v303 = vunpack.c.l.b16 %v286
    %v304 = vunpack.c.h.b16 %v286
    %v305 = vunpack.c.l.b16 %v287
    %v306 = vunpack.c.h.b16 %v287
    %v307 = vunpack.c.l.b16 %v288
    %v308 = vunpack.c.h.b16 %v288
    %v309 = vunpack.c.l.b16 %v289
    %v310 = vunpack.c.h.b16 %v289
    %v311 = vunpack.c.l.b16 %v290
    %v312 = vunpack.c.h.b16 %v290
    %v313 = vunpack.c.l.b16 %v291
    %v314 = vunpack.c.h.b16 %v291
    %v315 = vunpack.c.l.b16 %v292
    %v316 = vunpack.c.h.b16 %v292
    %v317 = vpack.c.b16 %v303, %v301
    %v318 = vpack.c.b16 %v304, %v302
    %v319 = vpack.c.b16 %v307, %v305
    %v320 = vpack.c.b16 %v308, %v306
    %v321 = vpack.c.b16 %v311, %v309
    %v322 = vpack.c.b16 %v312, %v310
    %v323 = vpack.c.b16 %v315, %v313
    %v324 = vpack.c.b16 %v316, %v314
    %vm333 = vcmask 523264
    %v335 = vsel %vm333, %v284, 0
    %337 = vmatpush.bf16.msra.mxu0 0
    %338 = vmatpush.bf16.msra.mxu0 0
    %339 = vmatpush.bf16.msra.mxu0 0
    %340 = vmatpush.bf16.msra.mxu0 0
    %341 = vmatpush.bf16.msra.mxu0 %v323
    %342 = vmatpush.bf16.msra.mxu0 %v321
    %343 = vmatpush.bf16.msra.mxu0 %v319
    %344 = vmatpush.bf16.msra.mxu0 %v317
    %345 = vmatmul.bf16.gmra.mxu0 %v335
    %v346 = vpop.f32.mrf.mxu0
    %v347 = vadd.f32 0.0, %v346
    %v348 = vpop.f32.mrf.mxu0
    %v349 = vadd.f32 0.0, %v348
    %350 = vdwg.mxu0
    %351 = vmatpush.bf16.msra.mxu0 0
    %352 = vmatpush.bf16.msra.mxu0 0
    %353 = vmatpush.bf16.msra.mxu0 0
    %354 = vmatpush.bf16.msra.mxu0 0
    %355 = vmatpush.bf16.msra.mxu0 %v324
    %356 = vmatpush.bf16.msra.mxu0 %v322
    %357 = vmatpush.bf16.msra.mxu0 %v320
    %358 = vmatpush.bf16.msra.mxu0 %v318
    %359 = vmatmul.bf16.gmra.mxu0 %v335
    %v360 = vpop.f32.mrf.mxu0
    %v361 = vadd.f32 0.0, %v360
    %v362 = vpop.f32.mrf.mxu0
    %v363 = vadd.f32 0.0, %v362
    %364 = vdwg.mxu0
    %v365 = vadd.f32 %v264, %v347
    %v366 = vadd.f32 %v278, %v361
    %v367 = vadd.f32 %v266, %v349
    %v368 = vadd.f32 %v280, %v363
    %v369 = vld [vmem:[%s6] sm:$0x3]
    %v371 = vperm.slane %v369, 0
    %v372 = vperm.slane %v369, 1
    %v375 = vadd.f32 %v365, %v371
    %v376 = vadd.f32 %v366, %v372
    %v377 = vadd.f32 %v367, %v371
    %v378 = vadd.f32 %v368, %v372
    %379 = vst [vmem:[#allocation2] sm:$0xff] %v375
    %380 = vst.msk [vmem:[#allocation2 + $0x8] sm:$0xff] %vm333, %v376
    %381 = vst [vmem:[#allocation2 + $0x10] sm:$0xff] %v377
    %382 = vst.msk [vmem:[#allocation2 + $0x18] sm:$0xff] %vm333, %v378
    // Predicated region
    $region30: #{tpu_custom_call.1} parent=1 // pred_check
      _
    $region31: #{tpu_custom_call.1} parent=1 // pred_check_branch
      %384 = sbr.rel (0) target = $region33
    $region32: #{tpu_custom_call.1} parent=1 // pred_region
      %386 = vsyncadd [#allocation3], 0
      %s387 = sshll.u32 [#allocation2], 4
      %s388 = int_to_ptr.vmem [resolvable:$true] %s387
      %s389 = sshll.u32 %s7, 4
      %s390 = int_to_ptr.hbm [resolvable:$true] %s389
      %395 = dma.vmem_to_hbm [thread:$0]  %s388, 512, %s390, [#allocation3], 256, 256, 16
    $region33: #{tpu_custom_call.1} parent=1 // pred_fallthru
      _
    // Predicated region
    $region34: #{tpu_custom_call.1} parent=1 // pred_check
      _
    $region35: #{tpu_custom_call.1} parent=1 // pred_check_branch
      %397 = sbr.rel (0) target = $region37
    $region36: #{tpu_custom_call.1} parent=1 // pred_region
      %399 = dma.done [#allocation3], 512
    $region37: #{tpu_custom_call.1} parent=1 // pred_fallthru
      _
    %400 = vsyncpa [#allocation3], 1

</llo_original>
